<compile_context>
chip_gen: v7x
topology: tpu7x:2x2x1
jax: 0.10.0
libtpu: 0.0.40
codegen_flags: <defaults>
</compile_context>

<pallas_src>
import numpy as np
import jax
import jax.numpy as jnp
from jax.experimental import pallas as pl
from jax.experimental.pallas import tpu as pltpu


def spectral_conv1d_kernel(x_ref, fwd_ref, wr_ref, wi_ref, inv_ref, o_ref):
    # x_ref  : (TB, C_in, L)       batch tile, channels on sublanes, L on lanes
    # fwd_ref: (L, 2M)             fused forward truncated-DFT matrix [cos | -sin]
    # wr/wi  : (C_in, C_out, M)    real / imag parts of the spectral weights
    # inv_ref: (2M, L)             fused inverse-DFT matrix [c*cos ; c*sin]
    # o_ref  : (TB, C_out, L)
    TB, C_in, L = x_ref.shape
    _, C_out, M = wr_ref.shape

    # Truncated rfft, real+imag in ONE MXU matmul: (TB*C_in, L) @ (L, 2M).
    x2 = x_ref[...].reshape(TB * C_in, L)
    xf = jnp.dot(x2, fwd_ref[...], preferred_element_type=jnp.float32)    # (TB*C_in, 2M)
    xf = xf.reshape(TB, C_in, 2 * M)
    xr = xf[:, :, :M]                                                     # (TB, C_in, M)
    xi = xf[:, :, M:]                                                     # (TB, C_in, M)

    wr = wr_ref[...]
    wi = wi_ref[...]

    # Complex channel mix 'bim,iom->bom'.  C_in is tiny, so unroll it and keep
    # the live accumulators at (TB, C_out, M) — cheap VPU work hidden under MXU.
    yr = jnp.zeros((TB, C_out, M), jnp.float32)
    yi = jnp.zeros((TB, C_out, M), jnp.float32)
    for i in range(C_in):
        xr_i = xr[:, i, :][:, None, :]                                    # (TB, 1, M)
        xi_i = xi[:, i, :][:, None, :]
        wr_i = wr[i][None, :, :]                                          # (1, C_out, M)
        wi_i = wi[i][None, :, :]
        yr = yr + xr_i * wr_i - xi_i * wi_i
        yi = yi + xr_i * wi_i + xi_i * wr_i

    # Truncated irfft back to length L in ONE MXU matmul:
    #   y = Yr @ Ci - Yi @ Si = [Yr | -Yi] @ [Ci ; Si]
    yc = jnp.concatenate([yr, -yi], axis=-1).reshape(TB * C_out, 2 * M)
    y = jnp.dot(yc, inv_ref[...], preferred_element_type=jnp.float32)     # (TB*C_out, L)
    o_ref[...] = y.reshape(TB, C_out, L).astype(o_ref.dtype)


def _dft_matrices(L, modes1):
    """Fused truncated real-DFT / inverse-DFT matrices (built in f64, stored f32)."""
    m = np.arange(L, dtype=np.float64)[:, None]            # (L, 1) time index
    k = np.arange(modes1, dtype=np.float64)[None, :]       # (1, M) mode index
    ang_f = 2.0 * np.pi * m * k / L
    cf = np.cos(ang_f)                                     # (L, M)
    sf = np.sin(ang_f)                                     # (L, M)
    fwd = np.concatenate([cf, -sf], axis=1)                # (L, 2M): x@fwd = [Xr | Xi]

    # irfft scaling: 1/L for DC (and Nyquist, if present), 2/L for the rest.
    c = np.full((modes1,), 2.0 / L, dtype=np.float64)
    c[0] = 1.0 / L
    if L % 2 == 0 and modes1 - 1 == L // 2:
        c[-1] = 1.0 / L

    n = np.arange(L, dtype=np.float64)[None, :]            # (1, L) output index
    k2 = np.arange(modes1, dtype=np.float64)[:, None]      # (M, 1)
    ang_i = 2.0 * np.pi * k2 * n / L
    ci = c[:, None] * np.cos(ang_i)                        # (M, L)
    si = c[:, None] * np.sin(ang_i)                        # (M, L)
    inv = np.concatenate([ci, si], axis=0)                 # (2M, L): [Yr | -Yi] @ inv

    return jnp.asarray(fwd, jnp.float32), jnp.asarray(inv, jnp.float32)


def spectral_conv1d_forward(x, w_real, w_imag):
    """x: (B, C_in, L) f32;  w_real / w_imag: (C_in, C_out, modes1) f32."""
    B, C_in, L = x.shape
    _, C_out, M = w_real.shape
    assert M <= L // 2 + 1, "modes1 must not exceed L//2 + 1"

    fwd, inv = _dft_matrices(L, M)

    # --- batch tile: fill the MXU row dimension (256 rows on v6e/v7x; a 128-row
    # tile already saturates v5e's 4x128x128 MXU and smaller TB just saves VMEM).
    target_rows = 256
    TB = max(1, min(B, target_rows // max(C_in, 1)))
    # Keep double-buffered (TB,C_in,L)+(TB,C_out,L) f32 blocks within a ~40 MiB
    # budget so the kernel also fits v7x's 64 MiB VMEM with pipelining intact.
    io_budget = 40 * 1024 * 1024
    while TB > 1 and 2 * TB * (C_in + C_out) * L * 4 > io_budget:
        TB //= 2
    # v7x has 2 TensorCores: prefer >= 2 grid steps, but only shrink TB if the
    # MXU still keeps >= 128 LHS rows.
    if pl.cdiv(B, TB) < 2 and (TB // 2) * C_in >= 128:
        TB //= 2

    grid_b = pl.cdiv(B, TB)
    B_pad = grid_b * TB
    if B_pad != B:
        x = jnp.pad(x, ((0, B_pad - B), (0, 0), (0, 0)))

    # Explicit VMEM limit (default scoped limit is 32 MiB); cap at 64 MiB so the
    # same request is valid on v7x's smaller physical VMEM.
    const_bytes = 2 * 4 * int(fwd.size + inv.size + w_real.size + w_imag.size)
    io_bytes = 2 * TB * (C_in + C_out) * L * 4
    vmem_limit = int(min(64 * 1024 * 1024,
                         max(32 * 1024 * 1024, 2 * (const_bytes + io_bytes))))

    out = pl.pallas_call(
        spectral_conv1d_kernel,
        out_shape=jax.ShapeDtypeStruct((B_pad, C_out, L), x.dtype),
        grid_spec=pltpu.PrefetchScalarGridSpec(
            num_scalar_prefetch=0,
            grid=(grid_b,),                                   # independent batch tiles
            in_specs=[
                pl.BlockSpec((TB, C_in, L), lambda b: (b, 0, 0)),     # x, NCL-native
                pl.BlockSpec((L, 2 * M), lambda b: (0, 0)),           # fwd (resident)
                pl.BlockSpec((C_in, C_out, M), lambda b: (0, 0, 0)),  # wr  (resident)
                pl.BlockSpec((C_in, C_out, M), lambda b: (0, 0, 0)),  # wi  (resident)
                pl.BlockSpec((2 * M, L), lambda b: (0, 0)),           # inv (resident)
            ],
            out_specs=pl.BlockSpec((TB, C_out, L), lambda b: (b, 0, 0)),
        ),
        compiler_params=pltpu.CompilerParams(
            dimension_semantics=("parallel",),   # shard batch tiles over v7x's 2 TCs
            vmem_limit_bytes=vmem_limit),
    )(x, fwd, w_real, w_imag, inv)
    return out[:B]


def reference_forward(x, w_real, w_imag):
    """Pure-JAX mirror of the PyTorch forward (rfft -> complex mix -> irfft)."""
    B, C_in, L = x.shape
    _, C_out, M = w_real.shape
    w = w_real + 1j * w_imag
    x_ft = jnp.fft.rfft(x)                                      # (B, C_in, L//2+1)
    out_modes = jnp.einsum('bix,iox->box', x_ft[:, :, :M], w)   # (B, C_out, M)
    out_ft = jnp.zeros((B, C_out, L // 2 + 1), dtype=out_modes.dtype)
    out_ft = out_ft.at[:, :, :M].set(out_modes)
    return jnp.fft.irfft(out_ft, n=L)


if __name__ == "__main__":
    # Small shapes consistent with SpectralConv1d(in=4, out=4, modes1=8), L=16, B=2
    B, C_in, C_out, L, modes1 = 2, 4, 4, 16, 8

    key = jax.random.PRNGKey(0)
    kx, kr, ki = jax.random.split(key, 3)

    x = jax.random.normal(kx, (B, C_in, L), dtype=jnp.float32)
    scale = 1.0 / (C_in * C_out)
    # torch.rand(..., dtype=cfloat): real & imag parts each uniform in [0, 1)
    w_real = scale * jax.random.uniform(kr, (C_in, C_out, modes1), dtype=jnp.float32)
    w_imag = scale * jax.random.uniform(ki, (C_in, C_out, modes1), dtype=jnp.float32)

    out = spectral_conv1d_forward(x, w_real, w_imag)
    out = jax.block_until_ready(out)

    ref = reference_forward(x, w_real, w_imag)
    assert out.shape == (B, C_out, L)
    # Tolerance covers FFT-vs-truncated-DFT algorithmic differences and MXU f32 passes.
    assert jnp.allclose(out, ref, atol=1e-3, rtol=1e-3), \
        f"max abs err {jnp.max(jnp.abs(out - ref))}"

    print("KERNEL_OK")
</pallas_src>

<mosaic_0001>
module attributes {stable_mosaic.version = 11 : i64} {
  func.func @spectral_conv1d_kernel(%arg0: i32, %arg1: memref<2x4x16xf32, #tpu.memory_space<vmem>>, %arg2: memref<16x16xf32, #tpu.memory_space<vmem>>, %arg3: memref<4x4x8xf32, #tpu.memory_space<vmem>>, %arg4: memref<4x4x8xf32, #tpu.memory_space<vmem>>, %arg5: memref<16x16xf32, #tpu.memory_space<vmem>>, %arg6: memref<2x4x16xf32, #tpu.memory_space<vmem>>) attributes {dimension_semantics = [#tpu.dimension_semantics<parallel>], iteration_bounds = array<i64: 1>, scalar_prefetch = 0 : i64, scratch_operands = 0 : i64, tpu.core_type = #tpu.core_type<tc>, window_params = [{transform_indices = @transform_0, window_bounds = array<i64: 2, 4, 16>}, {pipeline_mode = #tpu.pipeline_mode<synchronous>, transform_indices = @transform_1, window_bounds = array<i64: 16, 16>}, {pipeline_mode = #tpu.pipeline_mode<synchronous>, transform_indices = @transform_2, window_bounds = array<i64: 4, 4, 8>}, {pipeline_mode = #tpu.pipeline_mode<synchronous>, transform_indices = @transform_3, window_bounds = array<i64: 4, 4, 8>}, {pipeline_mode = #tpu.pipeline_mode<synchronous>, transform_indices = @transform_4, window_bounds = array<i64: 16, 16>}, {transform_indices = @transform_5, window_bounds = array<i64: 2, 4, 16>}]} {
    %c0 = arith.constant 0 : index
    %c0_0 = arith.constant 0 : index
    %c0_1 = arith.constant 0 : index
    %0 = vector.load %arg1[%c0, %c0_0, %c0_1] : memref<2x4x16xf32, #tpu.memory_space<vmem>>, vector<2x4x16xf32>
    %1 = vector.shape_cast %0 : vector<2x4x16xf32> to vector<8x16xf32>
    %c0_2 = arith.constant 0 : index
    %c0_3 = arith.constant 0 : index
    %2 = vector.load %arg2[%c0_2, %c0_3] : memref<16x16xf32, #tpu.memory_space<vmem>>, vector<16x16xf32>
    %cst = arith.constant dense<0.000000e+00> : vector<8x16xf32>
    %3 = tpu.matmul %1, %2, %cst {dimension_numbers = #tpu.dot_dimension_numbers<[1], [0], [0], [1], [0, 0, 1, 1], [], []>} : vector<8x16xf32>, vector<16x16xf32>, vector<8x16xf32> -> vector<8x16xf32>
    %4 = vector.shape_cast %3 : vector<8x16xf32> to vector<2x4x16xf32>
    %5 = vector.extract_strided_slice %4 {offsets = [0, 0, 0], sizes = [2, 4, 8], strides = [1, 1, 1]} : vector<2x4x16xf32> to vector<2x4x8xf32>
    %6 = vector.extract_strided_slice %4 {offsets = [0, 0, 8], sizes = [2, 4, 8], strides = [1, 1, 1]} : vector<2x4x16xf32> to vector<2x4x8xf32>
    %c0_4 = arith.constant 0 : index
    %c0_5 = arith.constant 0 : index
    %c0_6 = arith.constant 0 : index
    %7 = vector.load %arg3[%c0_4, %c0_5, %c0_6] : memref<4x4x8xf32, #tpu.memory_space<vmem>>, vector<4x4x8xf32>
    %c0_7 = arith.constant 0 : index
    %c0_8 = arith.constant 0 : index
    %c0_9 = arith.constant 0 : index
    %8 = vector.load %arg4[%c0_7, %c0_8, %c0_9] : memref<4x4x8xf32, #tpu.memory_space<vmem>>, vector<4x4x8xf32>
    %cst_10 = arith.constant 0.000000e+00 : f32
    %9 = vector.broadcast %cst_10 : f32 to vector<2x4x8xf32>
    %cst_11 = arith.constant 0.000000e+00 : f32
    %10 = vector.broadcast %cst_11 : f32 to vector<2x4x8xf32>
    %11 = vector.extract_strided_slice %5 {offsets = [0, 0, 0], sizes = [2, 1, 8], strides = [1, 1, 1]} : vector<2x4x8xf32> to vector<2x1x8xf32>
    %12 = vector.shape_cast %11 : vector<2x1x8xf32> to vector<2x8xf32>
    %13 = vector.shape_cast %12 : vector<2x8xf32> to vector<2x1x8xf32>
    %14 = vector.extract_strided_slice %6 {offsets = [0, 0, 0], sizes = [2, 1, 8], strides = [1, 1, 1]} : vector<2x4x8xf32> to vector<2x1x8xf32>
    %15 = vector.shape_cast %14 : vector<2x1x8xf32> to vector<2x8xf32>
    %16 = vector.shape_cast %15 : vector<2x8xf32> to vector<2x1x8xf32>
    %17 = vector.extract_strided_slice %7 {offsets = [0, 0, 0], sizes = [1, 4, 8], strides = [1, 1, 1]} : vector<4x4x8xf32> to vector<1x4x8xf32>
    %18 = vector.shape_cast %17 : vector<1x4x8xf32> to vector<4x8xf32>
    %19 = vector.shape_cast %18 : vector<4x8xf32> to vector<1x4x8xf32>
    %20 = vector.extract_strided_slice %8 {offsets = [0, 0, 0], sizes = [1, 4, 8], strides = [1, 1, 1]} : vector<4x4x8xf32> to vector<1x4x8xf32>
    %21 = vector.shape_cast %20 : vector<1x4x8xf32> to vector<4x8xf32>
    %22 = vector.shape_cast %21 : vector<4x8xf32> to vector<1x4x8xf32>
    %23 = vector.broadcast %13 : vector<2x1x8xf32> to vector<2x4x8xf32>
    %24 = vector.broadcast %19 : vector<1x4x8xf32> to vector<2x4x8xf32>
    %25 = arith.mulf %23, %24 : vector<2x4x8xf32>
    %26 = arith.addf %9, %25 : vector<2x4x8xf32>
    %27 = vector.broadcast %16 : vector<2x1x8xf32> to vector<2x4x8xf32>
    %28 = vector.broadcast %22 : vector<1x4x8xf32> to vector<2x4x8xf32>
    %29 = arith.mulf %27, %28 : vector<2x4x8xf32>
    %30 = arith.subf %26, %29 : vector<2x4x8xf32>
    %31 = vector.broadcast %13 : vector<2x1x8xf32> to vector<2x4x8xf32>
    %32 = vector.broadcast %22 : vector<1x4x8xf32> to vector<2x4x8xf32>
    %33 = arith.mulf %31, %32 : vector<2x4x8xf32>
    %34 = arith.addf %10, %33 : vector<2x4x8xf32>
    %35 = vector.broadcast %16 : vector<2x1x8xf32> to vector<2x4x8xf32>
    %36 = vector.broadcast %19 : vector<1x4x8xf32> to vector<2x4x8xf32>
    %37 = arith.mulf %35, %36 : vector<2x4x8xf32>
    %38 = arith.addf %34, %37 : vector<2x4x8xf32>
    %39 = vector.extract_strided_slice %5 {offsets = [0, 1, 0], sizes = [2, 1, 8], strides = [1, 1, 1]} : vector<2x4x8xf32> to vector<2x1x8xf32>
    %40 = vector.shape_cast %39 : vector<2x1x8xf32> to vector<2x8xf32>
    %41 = vector.shape_cast %40 : vector<2x8xf32> to vector<2x1x8xf32>
    %42 = vector.extract_strided_slice %6 {offsets = [0, 1, 0], sizes = [2, 1, 8], strides = [1, 1, 1]} : vector<2x4x8xf32> to vector<2x1x8xf32>
    %43 = vector.shape_cast %42 : vector<2x1x8xf32> to vector<2x8xf32>
    %44 = vector.shape_cast %43 : vector<2x8xf32> to vector<2x1x8xf32>
    %45 = vector.extract_strided_slice %7 {offsets = [1, 0, 0], sizes = [1, 4, 8], strides = [1, 1, 1]} : vector<4x4x8xf32> to vector<1x4x8xf32>
    %46 = vector.shape_cast %45 : vector<1x4x8xf32> to vector<4x8xf32>
    %47 = vector.shape_cast %46 : vector<4x8xf32> to vector<1x4x8xf32>
    %48 = vector.extract_strided_slice %8 {offsets = [1, 0, 0], sizes = [1, 4, 8], strides = [1, 1, 1]} : vector<4x4x8xf32> to vector<1x4x8xf32>
    %49 = vector.shape_cast %48 : vector<1x4x8xf32> to vector<4x8xf32>
    %50 = vector.shape_cast %49 : vector<4x8xf32> to vector<1x4x8xf32>
    %51 = vector.broadcast %41 : vector<2x1x8xf32> to vector<2x4x8xf32>
    %52 = vector.broadcast %47 : vector<1x4x8xf32> to vector<2x4x8xf32>
    %53 = arith.mulf %51, %52 : vector<2x4x8xf32>
    %54 = arith.addf %30, %53 : vector<2x4x8xf32>
    %55 = vector.broadcast %44 : vector<2x1x8xf32> to vector<2x4x8xf32>
    %56 = vector.broadcast %50 : vector<1x4x8xf32> to vector<2x4x8xf32>
    %57 = arith.mulf %55, %56 : vector<2x4x8xf32>
    %58 = arith.subf %54, %57 : vector<2x4x8xf32>
    %59 = vector.broadcast %41 : vector<2x1x8xf32> to vector<2x4x8xf32>
    %60 = vector.broadcast %50 : vector<1x4x8xf32> to vector<2x4x8xf32>
    %61 = arith.mulf %59, %60 : vector<2x4x8xf32>
    %62 = arith.addf %38, %61 : vector<2x4x8xf32>
    %63 = vector.broadcast %44 : vector<2x1x8xf32> to vector<2x4x8xf32>
    %64 = vector.broadcast %47 : vector<1x4x8xf32> to vector<2x4x8xf32>
    %65 = arith.mulf %63, %64 : vector<2x4x8xf32>
    %66 = arith.addf %62, %65 : vector<2x4x8xf32>
    %67 = vector.extract_strided_slice %5 {offsets = [0, 2, 0], sizes = [2, 1, 8], strides = [1, 1, 1]} : vector<2x4x8xf32> to vector<2x1x8xf32>
    %68 = vector.shape_cast %67 : vector<2x1x8xf32> to vector<2x8xf32>
    %69 = vector.shape_cast %68 : vector<2x8xf32> to vector<2x1x8xf32>
    %70 = vector.extract_strided_slice %6 {offsets = [0, 2, 0], sizes = [2, 1, 8], strides = [1, 1, 1]} : vector<2x4x8xf32> to vector<2x1x8xf32>
    %71 = vector.shape_cast %70 : vector<2x1x8xf32> to vector<2x8xf32>
    %72 = vector.shape_cast %71 : vector<2x8xf32> to vector<2x1x8xf32>
    %73 = vector.extract_strided_slice %7 {offsets = [2, 0, 0], sizes = [1, 4, 8], strides = [1, 1, 1]} : vector<4x4x8xf32> to vector<1x4x8xf32>
    %74 = vector.shape_cast %73 : vector<1x4x8xf32> to vector<4x8xf32>
    %75 = vector.shape_cast %74 : vector<4x8xf32> to vector<1x4x8xf32>
    %76 = vector.extract_strided_slice %8 {offsets = [2, 0, 0], sizes = [1, 4, 8], strides = [1, 1, 1]} : vector<4x4x8xf32> to vector<1x4x8xf32>
    %77 = vector.shape_cast %76 : vector<1x4x8xf32> to vector<4x8xf32>
    %78 = vector.shape_cast %77 : vector<4x8xf32> to vector<1x4x8xf32>
    %79 = vector.broadcast %69 : vector<2x1x8xf32> to vector<2x4x8xf32>
    %80 = vector.broadcast %75 : vector<1x4x8xf32> to vector<2x4x8xf32>
    %81 = arith.mulf %79, %80 : vector<2x4x8xf32>
    %82 = arith.addf %58, %81 : vector<2x4x8xf32>
    %83 = vector.broadcast %72 : vector<2x1x8xf32> to vector<2x4x8xf32>
    %84 = vector.broadcast %78 : vector<1x4x8xf32> to vector<2x4x8xf32>
    %85 = arith.mulf %83, %84 : vector<2x4x8xf32>
    %86 = arith.subf %82, %85 : vector<2x4x8xf32>
    %87 = vector.broadcast %69 : vector<2x1x8xf32> to vector<2x4x8xf32>
    %88 = vector.broadcast %78 : vector<1x4x8xf32> to vector<2x4x8xf32>
    %89 = arith.mulf %87, %88 : vector<2x4x8xf32>
    %90 = arith.addf %66, %89 : vector<2x4x8xf32>
    %91 = vector.broadcast %72 : vector<2x1x8xf32> to vector<2x4x8xf32>
    %92 = vector.broadcast %75 : vector<1x4x8xf32> to vector<2x4x8xf32>
    %93 = arith.mulf %91, %92 : vector<2x4x8xf32>
    %94 = arith.addf %90, %93 : vector<2x4x8xf32>
    %95 = vector.extract_strided_slice %5 {offsets = [0, 3, 0], sizes = [2, 1, 8], strides = [1, 1, 1]} : vector<2x4x8xf32> to vector<2x1x8xf32>
    %96 = vector.shape_cast %95 : vector<2x1x8xf32> to vector<2x8xf32>
    %97 = vector.shape_cast %96 : vector<2x8xf32> to vector<2x1x8xf32>
    %98 = vector.extract_strided_slice %6 {offsets = [0, 3, 0], sizes = [2, 1, 8], strides = [1, 1, 1]} : vector<2x4x8xf32> to vector<2x1x8xf32>
    %99 = vector.shape_cast %98 : vector<2x1x8xf32> to vector<2x8xf32>
    %100 = vector.shape_cast %99 : vector<2x8xf32> to vector<2x1x8xf32>
    %101 = vector.extract_strided_slice %7 {offsets = [3, 0, 0], sizes = [1, 4, 8], strides = [1, 1, 1]} : vector<4x4x8xf32> to vector<1x4x8xf32>
    %102 = vector.shape_cast %101 : vector<1x4x8xf32> to vector<4x8xf32>
    %103 = vector.shape_cast %102 : vector<4x8xf32> to vector<1x4x8xf32>
    %104 = vector.extract_strided_slice %8 {offsets = [3, 0, 0], sizes = [1, 4, 8], strides = [1, 1, 1]} : vector<4x4x8xf32> to vector<1x4x8xf32>
    %105 = vector.shape_cast %104 : vector<1x4x8xf32> to vector<4x8xf32>
    %106 = vector.shape_cast %105 : vector<4x8xf32> to vector<1x4x8xf32>
    %107 = vector.broadcast %97 : vector<2x1x8xf32> to vector<2x4x8xf32>
    %108 = vector.broadcast %103 : vector<1x4x8xf32> to vector<2x4x8xf32>
    %109 = arith.mulf %107, %108 : vector<2x4x8xf32>
    %110 = arith.addf %86, %109 : vector<2x4x8xf32>
    %111 = vector.broadcast %100 : vector<2x1x8xf32> to vector<2x4x8xf32>
    %112 = vector.broadcast %106 : vector<1x4x8xf32> to vector<2x4x8xf32>
    %113 = arith.mulf %111, %112 : vector<2x4x8xf32>
    %114 = arith.subf %110, %113 : vector<2x4x8xf32>
    %115 = vector.broadcast %97 : vector<2x1x8xf32> to vector<2x4x8xf32>
    %116 = vector.broadcast %106 : vector<1x4x8xf32> to vector<2x4x8xf32>
    %117 = arith.mulf %115, %116 : vector<2x4x8xf32>
    %118 = arith.addf %94, %117 : vector<2x4x8xf32>
    %119 = vector.broadcast %100 : vector<2x1x8xf32> to vector<2x4x8xf32>
    %120 = vector.broadcast %103 : vector<1x4x8xf32> to vector<2x4x8xf32>
    %121 = arith.mulf %119, %120 : vector<2x4x8xf32>
    %122 = arith.addf %118, %121 : vector<2x4x8xf32>
    %cst_12 = arith.constant 0.000000e+00 : f32
    %123 = vector.broadcast %cst_12 : f32 to vector<2x4x8xf32>
    %124 = arith.subf %123, %122 : vector<2x4x8xf32>
    %125 = tpu.concatenate %114, %124 in 2 : vector<2x4x8xf32>, vector<2x4x8xf32> -> vector<2x4x16xf32>
    %126 = vector.shape_cast %125 : vector<2x4x16xf32> to vector<8x16xf32>
    %c0_13 = arith.constant 0 : index
    %c0_14 = arith.constant 0 : index
    %127 = vector.load %arg5[%c0_13, %c0_14] : memref<16x16xf32, #tpu.memory_space<vmem>>, vector<16x16xf32>
    %cst_15 = arith.constant dense<0.000000e+00> : vector<8x16xf32>
    %128 = tpu.matmul %126, %127, %cst_15 {dimension_numbers = #tpu.dot_dimension_numbers<[1], [0], [0], [1], [0, 0, 1, 1], [], []>} : vector<8x16xf32>, vector<16x16xf32>, vector<8x16xf32> -> vector<8x16xf32>
    %129 = vector.shape_cast %128 : vector<8x16xf32> to vector<2x4x16xf32>
    %c0_16 = arith.constant 0 : index
    %c0_17 = arith.constant 0 : index
    %c0_18 = arith.constant 0 : index
    %130 = vector.load %arg6[%c0_16, %c0_17, %c0_18] : memref<2x4x16xf32, #tpu.memory_space<vmem>>, vector<2x4x16xf32>
    tpu.vector_store %arg6[%c0_16, %c0_17, %c0_18], %129 {strides = array<i32>} : memref<2x4x16xf32, #tpu.memory_space<vmem>>, vector<2x4x16xf32>,
    return
  }
  func.func @transform_0(%arg0: i32) -> (i32, i32, i32) {
    %c0_i32 = arith.constant 0 : i32
    %c0_i32_0 = arith.constant 0 : i32
    %c0_i32_1 = arith.constant 0 : i32
    return %arg0, %c0_i32, %c0_i32_0 : i32, i32, i32
  }
  func.func @transform_1(%arg0: i32) -> (i32, i32) {
    %c0_i32 = arith.constant 0 : i32
    %c0_i32_0 = arith.constant 0 : i32
    %c0_i32_1 = arith.constant 0 : i32
    return %c0_i32, %c0_i32_0 : i32, i32
  }
  func.func @transform_2(%arg0: i32) -> (i32, i32, i32) {
    %c0_i32 = arith.constant 0 : i32
    %c0_i32_0 = arith.constant 0 : i32
    %c0_i32_1 = arith.constant 0 : i32
    %c0_i32_2 = arith.constant 0 : i32
    return %c0_i32, %c0_i32_0, %c0_i32_1 : i32, i32, i32
  }
  func.func @transform_3(%arg0: i32) -> (i32, i32, i32) {
    %c0_i32 = arith.constant 0 : i32
    %c0_i32_0 = arith.constant 0 : i32
    %c0_i32_1 = arith.constant 0 : i32
    %c0_i32_2 = arith.constant 0 : i32
    return %c0_i32, %c0_i32_0, %c0_i32_1 : i32, i32, i32
  }
  func.func @transform_4(%arg0: i32) -> (i32, i32) {
    %c0_i32 = arith.constant 0 : i32
    %c0_i32_0 = arith.constant 0 : i32
    %c0_i32_1 = arith.constant 0 : i32
    return %c0_i32, %c0_i32_0 : i32, i32
  }
  func.func @transform_5(%arg0: i32) -> (i32, i32, i32) {
    %c0_i32 = arith.constant 0 : i32
    %c0_i32_0 = arith.constant 0 : i32
    %c0_i32_1 = arith.constant 0 : i32
    return %arg0, %c0_i32, %c0_i32_0 : i32, i32, i32
  }
}

</mosaic_0001>

<llo_original>
// kernel: tpu_custom_call.1
$region0: #{tpu_custom_call.1}
  #allocation0 [shape = 'u32[]', space=smem, size = 0x4, offset = 0x4, fixed_abs, tag = 'smem constant byte address 0x4 - core index']
  #allocation1 [shape = 'u32[144,128]{1,0:T(1,128)}', space=vmem, size = 0x12000, scoped, tag = 'internal scratch']
  %s0 = inlined_call_operand.hbm [shape: f32[2,4,16], index: 0, kind: input, shape index: {}]
  %s1 = inlined_call_operand.hbm [shape: f32[16,16], index: 1, kind: input, shape index: {}]
  %s2 = inlined_call_operand.hbm [shape: f32[4,4,8], index: 2, kind: input, shape index: {}]
  %s3 = inlined_call_operand.hbm [shape: f32[4,4,8], index: 3, kind: input, shape index: {}]
  %s4 = inlined_call_operand.hbm [shape: f32[16,16], index: 4, kind: input, shape index: {}]
  %s5 = inlined_call_operand.hbm [shape: f32[2,4,16], index: 5, kind: output, shape index: {}]
  %s6 = sld [smem:[#allocation0]]
  $region50: #{tpu_custom_call.1} parent=0
    _
  %s8 = ssub.s32 1, %s6
  %s9 = scalar_select 0, %s8, %s6
  $region1: #{tpu_custom_call.1} parent=0
    #allocation2 [shape = 'u8[4096]{0}', space=vmem, size = 0x1000, scoped, tag = 'input window, operand 0, single buffered']
    #allocation3 [shape = 's32[1]{0}', space=sflag, size = 0x4, scoped, tag = 'scoped memory for tpu_custom_call.1']
    #allocation4 [shape = 's32[1]{0}', space=sflag, size = 0x4, scoped, tag = 'scoped memory for tpu_custom_call.1']
    #allocation5 [shape = 'u8[8192]{0}', space=vmem, size = 0x2000, scoped, tag = 'input window, operand 1, single buffered']
    #allocation6 [shape = 's32[1]{0}', space=sflag, size = 0x4, scoped, tag = 'scoped memory for tpu_custom_call.1']
    #allocation7 [shape = 'u8[8192]{0}', space=vmem, size = 0x2000, scoped, tag = 'input window, operand 2, single buffered']
    #allocation8 [shape = 'u8[8192]{0}', space=vmem, size = 0x2000, scoped, tag = 'input window, operand 3, single buffered']
    #allocation9 [shape = 's32[1]{0}', space=sflag, size = 0x4, scoped, tag = 'scoped memory for tpu_custom_call.1']
    #allocation10 [shape = 'u8[8192]{0}', space=vmem, size = 0x2000, scoped, tag = 'input window, operand 4, single buffered']
    #allocation11 [shape = 'u8[4096]{0}', space=vmem, size = 0x1000, scoped, tag = 'output window, operand 0, single buffered']
    %10 = vsyncpa [#allocation3], 0
    %11 = vsyncpa [#allocation6], 0
    %12 = vsyncpa [#allocation9], 0
    %13 = vsyncpa [#allocation4], 0
    // Predicated region
    $region2: #{tpu_custom_call.1} parent=1 // pred_check
      _
    $region3: #{tpu_custom_call.1} parent=1 // pred_check_branch
      %15 = sbr.rel (0) target = $region5
    $region4: #{tpu_custom_call.1} parent=1 // pred_region
      %s17 = ssub.s32 128, 128
      %18 = vsyncadd [#allocation3], %s17
      %s19 = sshll.u32 [#allocation2], 4
      %s20 = int_to_ptr.vmem [resolvable:$true] %s19
      %25 = dma.hbm_to_vmem [thread:$0]  %s0, 128, %s20, [#allocation3], 64, 64, 4
    $region5: #{tpu_custom_call.1} parent=1 // pred_fallthru
      _
    // Predicated region
    $region6: #{tpu_custom_call.1} parent=1 // pred_check
      _
    $region7: #{tpu_custom_call.1} parent=1 // pred_check_branch
      %27 = sbr.rel (0) target = $region9
    $region8: #{tpu_custom_call.1} parent=1 // pred_region
      %s29 = ssub.s32 256, 256
      %30 = vsyncadd [#allocation6], %s29
      %s31 = sshll.u32 [#allocation5], 4
      %s32 = int_to_ptr.vmem [resolvable:$true] %s31
      %37 = dma.hbm_to_vmem [thread:$0]  %s1, 256, %s32, [#allocation6], 128, 128, 8
    $region9: #{tpu_custom_call.1} parent=1 // pred_fallthru
      _
    // Predicated region
    $region10: #{tpu_custom_call.1} parent=1 // pred_check
      _
    $region11: #{tpu_custom_call.1} parent=1 // pred_check_branch
      %39 = sbr.rel (0) target = $region13
    $region12: #{tpu_custom_call.1} parent=1 // pred_region
      %s41 = ssub.s32 256, 256
      %42 = vsyncadd [#allocation6], %s41
      %s43 = sshll.u32 [#allocation7], 4
      %s44 = int_to_ptr.vmem [resolvable:$true] %s43
      %49 = dma.hbm_to_vmem [thread:$0]  %s2, 256, %s44, [#allocation6], 64, 64, 4
    $region13: #{tpu_custom_call.1} parent=1 // pred_fallthru
      _
    // Predicated region
    $region14: #{tpu_custom_call.1} parent=1 // pred_check
      _
    $region15: #{tpu_custom_call.1} parent=1 // pred_check_branch
      %51 = sbr.rel (0) target = $region17
    $region16: #{tpu_custom_call.1} parent=1 // pred_region
      %s53 = ssub.s32 256, 256
      %54 = vsyncadd [#allocation9], %s53
      %s55 = sshll.u32 [#allocation8], 4
      %s56 = int_to_ptr.vmem [resolvable:$true] %s55
      %61 = dma.hbm_to_vmem [thread:$0]  %s3, 256, %s56, [#allocation9], 64, 64, 4
    $region17: #{tpu_custom_call.1} parent=1 // pred_fallthru
      _
    // Predicated region
    $region18: #{tpu_custom_call.1} parent=1 // pred_check
      _
    $region19: #{tpu_custom_call.1} parent=1 // pred_check_branch
      %63 = sbr.rel (0) target = $region21
    $region20: #{tpu_custom_call.1} parent=1 // pred_region
      %s65 = ssub.s32 256, 256
      %66 = vsyncadd [#allocation9], %s65
      %s67 = sshll.u32 [#allocation10], 4
      %s68 = int_to_ptr.vmem [resolvable:$true] %s67
      %73 = dma.hbm_to_vmem [thread:$0]  %s4, 256, %s68, [#allocation9], 128, 128, 8
    $region21: #{tpu_custom_call.1} parent=1 // pred_fallthru
      _
    // Predicated region
    $region22: #{tpu_custom_call.1} parent=1 // pred_check
      _
    $region23: #{tpu_custom_call.1} parent=1 // pred_check_branch
      %75 = sbr.rel (0) target = $region25
    $region24: #{tpu_custom_call.1} parent=1 // pred_region
      %76 = dma.done [#allocation3], 128
    $region25: #{tpu_custom_call.1} parent=1 // pred_fallthru
      _
    // Predicated region
    $region26: #{tpu_custom_call.1} parent=1 // pred_check
      _
    $region27: #{tpu_custom_call.1} parent=1 // pred_check_branch
      %78 = sbr.rel (0) target = $region29
    $region28: #{tpu_custom_call.1} parent=1 // pred_region
      %79 = dma.done [#allocation6], 256
    $region29: #{tpu_custom_call.1} parent=1 // pred_fallthru
      _
    // Predicated region
    $region30: #{tpu_custom_call.1} parent=1 // pred_check
      _
    $region31: #{tpu_custom_call.1} parent=1 // pred_check_branch
      %81 = sbr.rel (0) target = $region33
    $region32: #{tpu_custom_call.1} parent=1 // pred_region
      %82 = dma.done [#allocation6], 256
    $region33: #{tpu_custom_call.1} parent=1 // pred_fallthru
      _
    // Predicated region
    $region34: #{tpu_custom_call.1} parent=1 // pred_check
      _
    $region35: #{tpu_custom_call.1} parent=1 // pred_check_branch
      %84 = sbr.rel (0) target = $region37
    $region36: #{tpu_custom_call.1} parent=1 // pred_region
      %85 = dma.done [#allocation9], 256
    $region37: #{tpu_custom_call.1} parent=1 // pred_fallthru
      _
    // Predicated region
    $region38: #{tpu_custom_call.1} parent=1 // pred_check
      _
    $region39: #{tpu_custom_call.1} parent=1 // pred_check_branch
      %87 = sbr.rel (0) target = $region41
    $region40: #{tpu_custom_call.1} parent=1 // pred_region
      %88 = dma.done [#allocation9], 256
    $region41: #{tpu_custom_call.1} parent=1 // pred_fallthru
      _
    %v89 = vld [vmem:[#allocation2] sm:$0xf]
    %v90 = vld [vmem:[#allocation2 + $0x4] sm:$0xf]
    %v91 = vld [vmem:[#allocation5] sm:$0xff]
    %v92 = vld [vmem:[#allocation5 + $0x8] sm:$0xff]
    %v95 = vcombine.low %v89, %v90
    %vm96 = vcmask 130048
    %v97 = vsel %vm96, %v95, 0
    %99 = vmatprep.subr.mxu0 0.0
    %100 = vmatpush1.msra.mxu0 %v91
    %101 = vmatprep.subr.mxu0 0.0
    %102 = vmatpush1.msra.mxu0 %v92
    %103 = vmatprep.subr.mxu0 0.0
    %104 = vmatpush1.msra.mxu0 0.0
    %105 = vmatprep.subr.mxu0 0.0
    %106 = vmatpush1.msra.mxu0 0.0
    %107 = vmatprep.subr.mxu0 0.0
    %108 = vmatpush1.msra.mxu0 0.0
    %109 = vmatprep.subr.mxu0 0.0
    %110 = vmatpush1.msra.mxu0 0.0
    %111 = vmatprep.subr.mxu0 0.0
    %112 = vmatpush1.msra.mxu0 0.0
    %113 = vmatprep.subr.mxu0 0.0
    %114 = vmatpush1.msra.mxu0 0.0
    %115 = vmatprep.subr.mxu0 0.0
    %116 = vmatpush1.msra.mxu0 0.0
    %117 = vmatprep.subr.mxu0 0.0
    %118 = vmatpush1.msra.mxu0 0.0
    %119 = vmatprep.subr.mxu0 0.0
    %120 = vmatpush1.msra.mxu0 0.0
    %121 = vmatprep.subr.mxu0 0.0
    %122 = vmatpush1.msra.mxu0 0.0
    %123 = vmatprep.subr.mxu0 0.0
    %124 = vmatpush1.msra.mxu0 0.0
    %125 = vmatprep.subr.mxu0 0.0
    %126 = vmatpush1.msra.mxu0 0.0
    %127 = vmatprep.subr.mxu0 0.0
    %128 = vmatpush1.msra.mxu0 0.0
    %129 = vmatprep.subr.mxu0 0.0
    %130 = vmatpush1.msra.mxu0 0.0
    %131 = vmatprep.subr.mxu0 0.0
    %132 = vmatpush1.msra.mxu0 0.0
    %133 = vmatprep.subr.mxu0 0.0
    %134 = vmatpush1.msra.mxu0 0.0
    %135 = vmatprep.subr.mxu0 0.0
    %136 = vmatpush1.msra.mxu0 0.0
    %137 = vmatprep.subr.mxu0 0.0
    %138 = vmatpush1.msra.mxu0 0.0
    %139 = vmatprep.subr.mxu0 0.0
    %140 = vmatpush1.msra.mxu0 0.0
    %141 = vmatprep.subr.mxu0 0.0
    %142 = vmatpush1.msra.mxu0 0.0
    %143 = vmatprep.subr.mxu0 0.0
    %144 = vmatpush1.msra.mxu0 0.0
    %145 = vmatprep.subr.mxu0 0.0
    %146 = vmatpush1.msra.mxu0 0.0
    %147 = vmatprep.subr.mxu0 0.0
    %148 = vmatpush1.msra.mxu0 0.0
    %149 = vmatprep.subr.mxu0 0.0
    %150 = vmatpush1.msra.mxu0 0.0
    %151 = vmatprep.subr.mxu0 0.0
    %152 = vmatpush1.msra.mxu0 0.0
    %153 = vmatprep.subr.mxu0 0.0
    %154 = vmatpush1.msra.mxu0 0.0
    %155 = vmatprep.subr.mxu0 0.0
    %156 = vmatpush1.msra.mxu0 0.0
    %157 = vmatprep.subr.mxu0 0.0
    %158 = vmatpush1.msra.mxu0 0.0
    %159 = vmatprep.subr.mxu0 0.0
    %160 = vmatpush1.msra.mxu0 0.0
    %161 = vmatprep.subr.mxu0 0.0
    %162 = vmatpush1.msra.mxu0 0.0
    %163 = vmatprep.mubr.f32.mxu0 0.0
    %164 = vmatmul.mubr.f32.gmra.mrb[0].mxu0 %v97
    %v165 = vpop.f32.mrb[0].mxu0
    %v166 = vadd.f32 0.0, %v165
    %v167 = vpop.f32.mrb[0].mxu0
    %168 = vdwg.mxu0
    %v170 = vcombine.high %v166, %v166
    %v172 = vld [vmem:[#allocation7] sm:$0xf]
    %v173 = vld [vmem:[#allocation7 + $0x4] sm:$0xf]
    %v174 = vld [vmem:[#allocation7 + $0x8] sm:$0xf]
    %v175 = vld [vmem:[#allocation7 + $0xc] sm:$0xf]
    %v176 = vld [vmem:[#allocation8] sm:$0xf]
    %v177 = vld [vmem:[#allocation8 + $0x4] sm:$0xf]
    %v178 = vld [vmem:[#allocation8 + $0x8] sm:$0xf]
    %v179 = vld [vmem:[#allocation8 + $0xc] sm:$0xf]
    %v180 = vlaneseq
    %v181 = vshrl.u32 %v180, 7
    %v182 = vsub.s32 0, %v181
    %v183 = vrot.slane %v166, %v182
    %v184 = vlaneseq
    %v185 = vshrl.u32 %v184, 7
    %v186 = vsub.s32 0, %v185
    %v187 = vrot.slane %v170, %v186
    %v188 = vmul.f32 %v183, %v172
    %v189 = vmul.f32 %v187, %v172
    %v190 = vadd.f32 %v188, 0.0
    %v191 = vadd.f32 %v189, 0.0
    %193 = vrot.lane.b32.xlu0 %v176, 8
    %v194 = vpop.permute.xlu0 %193
    %v196 = vmul.f32 %v183, %v194
    %v197 = vmul.f32 %v187, %v194
    %200 = vrot.lane.b32.xlu0 %v196, 120
    %v201 = vpop.permute.xlu0 %200
    %202 = vrot.lane.b32.xlu0 %v197, 120
    %v203 = vpop.permute.xlu0 %202
    %v206 = vsub.f32 %v190, %v201
    %v207 = vsub.f32 %v191, %v203
    %v208 = vmul.f32 %v183, %v176
    %v209 = vmul.f32 %v187, %v176
    %v210 = vadd.f32 %v208, 0.0
    %v211 = vadd.f32 %v209, 0.0
    %213 = vrot.lane.b32.xlu0 %v172, 8
    %v214 = vpop.permute.xlu0 %213
    %v216 = vmul.f32 %v183, %v214
    %v217 = vmul.f32 %v187, %v214
    %220 = vrot.lane.b32.xlu0 %v216, 120
    %v221 = vpop.permute.xlu0 %220
    %222 = vrot.lane.b32.xlu0 %v217, 120
    %v223 = vpop.permute.xlu0 %222
    %v226 = vadd.f32 %v210, %v221
    %v227 = vadd.f32 %v211, %v223
    %v228 = vlaneseq
    %v229 = vshrl.u32 %v228, 7
    %v230 = vsub.s32 1, %v229
    %v231 = vrot.slane %v166, %v230
    %v232 = vlaneseq
    %v233 = vshrl.u32 %v232, 7
    %v234 = vsub.s32 1, %v233
    %v235 = vrot.slane %v170, %v234
    %v236 = vmul.f32 %v231, %v173
    %v237 = vmul.f32 %v235, %v173
    %v238 = vadd.f32 %v206, %v236
    %v239 = vadd.f32 %v207, %v237
    %241 = vrot.lane.b32.xlu0 %v177, 8
    %v242 = vpop.permute.xlu0 %241
    %v244 = vmul.f32 %v231, %v242
    %v245 = vmul.f32 %v235, %v242
    %248 = vrot.lane.b32.xlu0 %v244, 120
    %v249 = vpop.permute.xlu0 %248
    %250 = vrot.lane.b32.xlu0 %v245, 120
    %v251 = vpop.permute.xlu0 %250
    %v254 = vsub.f32 %v238, %v249
    %v255 = vsub.f32 %v239, %v251
    %v256 = vmul.f32 %v231, %v177
    %v257 = vmul.f32 %v235, %v177
    %v258 = vadd.f32 %v226, %v256
    %v259 = vadd.f32 %v227, %v257
    %261 = vrot.lane.b32.xlu0 %v173, 8
    %v262 = vpop.permute.xlu0 %261
    %v264 = vmul.f32 %v231, %v262
    %v265 = vmul.f32 %v235, %v262
    %268 = vrot.lane.b32.xlu0 %v264, 120
    %v269 = vpop.permute.xlu0 %268
    %270 = vrot.lane.b32.xlu0 %v265, 120
    %v271 = vpop.permute.xlu0 %270
    %v274 = vadd.f32 %v258, %v269
    %v275 = vadd.f32 %v259, %v271
    %v276 = vlaneseq
    %v277 = vshrl.u32 %v276, 7
    %v278 = vsub.s32 2, %v277
    %v279 = vrot.slane %v166, %v278
    %v280 = vlaneseq
    %v281 = vshrl.u32 %v280, 7
    %v282 = vsub.s32 2, %v281
    %v283 = vrot.slane %v170, %v282
    %v284 = vmul.f32 %v279, %v174
    %v285 = vmul.f32 %v283, %v174
    %v286 = vadd.f32 %v254, %v284
    %v287 = vadd.f32 %v255, %v285
    %289 = vrot.lane.b32.xlu0 %v178, 8
    %v290 = vpop.permute.xlu0 %289
    %v292 = vmul.f32 %v279, %v290
    %v293 = vmul.f32 %v283, %v290
    %296 = vrot.lane.b32.xlu0 %v292, 120
    %v297 = vpop.permute.xlu0 %296
    %298 = vrot.lane.b32.xlu0 %v293, 120
    %v299 = vpop.permute.xlu0 %298
    %v302 = vsub.f32 %v286, %v297
    %v303 = vsub.f32 %v287, %v299
    %v304 = vmul.f32 %v279, %v178
    %v305 = vmul.f32 %v283, %v178
    %v306 = vadd.f32 %v274, %v304
    %v307 = vadd.f32 %v275, %v305
    %309 = vrot.lane.b32.xlu0 %v174, 8
    %v310 = vpop.permute.xlu0 %309
    %v312 = vmul.f32 %v279, %v310
    %v313 = vmul.f32 %v283, %v310
    %316 = vrot.lane.b32.xlu0 %v312, 120
    %v317 = vpop.permute.xlu0 %316
    %318 = vrot.lane.b32.xlu0 %v313, 120
    %v319 = vpop.permute.xlu0 %318
    %v322 = vadd.f32 %v306, %v317
    %v323 = vadd.f32 %v307, %v319
    %v324 = vlaneseq
    %v325 = vshrl.u32 %v324, 7
    %v326 = vsub.s32 3, %v325
    %v327 = vrot.slane %v166, %v326
    %v328 = vlaneseq
    %v329 = vshrl.u32 %v328, 7
    %v330 = vsub.s32 3, %v329
    %v331 = vrot.slane %v170, %v330
    %v332 = vmul.f32 %v327, %v175
    %v333 = vmul.f32 %v331, %v175
    %v334 = vadd.f32 %v302, %v332
    %v335 = vadd.f32 %v303, %v333
    %337 = vrot.lane.b32.xlu0 %v179, 8
    %v338 = vpop.permute.xlu0 %337
    %v340 = vmul.f32 %v327, %v338
    %v341 = vmul.f32 %v331, %v338
    %344 = vrot.lane.b32.xlu0 %v340, 120
    %v345 = vpop.permute.xlu0 %344
    %346 = vrot.lane.b32.xlu0 %v341, 120
    %v347 = vpop.permute.xlu0 %346
    %v350 = vsub.f32 %v334, %v345
    %v351 = vsub.f32 %v335, %v347
    %v352 = vmul.f32 %v327, %v179
    %v353 = vmul.f32 %v331, %v179
    %v354 = vadd.f32 %v322, %v352
    %v355 = vadd.f32 %v323, %v353
    %357 = vrot.lane.b32.xlu0 %v175, 8
    %v358 = vpop.permute.xlu0 %357
    %v360 = vmul.f32 %v327, %v358
    %v361 = vmul.f32 %v331, %v358
    %364 = vrot.lane.b32.xlu0 %v360, 120
    %v365 = vpop.permute.xlu0 %364
    %366 = vrot.lane.b32.xlu0 %v361, 120
    %v367 = vpop.permute.xlu0 %366
    %v370 = vadd.f32 %v354, %v365
    %v371 = vadd.f32 %v355, %v367
    %v372 = vsub.f32 0.0, %v370
    %v373 = vsub.f32 0.0, %v371
    %376 = vrot.lane.b32.xlu0 %v372, 8
    %v377 = vpop.permute.xlu0 %376
    %378 = vrot.lane.b32.xlu0 %v373, 8
    %v379 = vpop.permute.xlu0 %378
    %vm382 = vcmask 64512
    %v383 = vsel %vm382, %v350, %v377
    %v384 = vsel %vm382, %v351, %v379
    %v385 = vld [vmem:[#allocation10] sm:$0xff]
    %v386 = vld [vmem:[#allocation10 + $0x8] sm:$0xff]
    %v389 = vcombine.low %v383, %v384
    %v390 = vsel %vm96, %v389, 0
    %392 = vmatprep.subr.mxu0 0.0
    %393 = vmatpush1.msra.mxu0 %v385
    %394 = vmatprep.subr.mxu0 0.0
    %395 = vmatpush1.msra.mxu0 %v386
    %396 = vmatprep.subr.mxu0 0.0
    %397 = vmatpush1.msra.mxu0 0.0
    %398 = vmatprep.subr.mxu0 0.0
    %399 = vmatpush1.msra.mxu0 0.0
    %400 = vmatprep.subr.mxu0 0.0
    %401 = vmatpush1.msra.mxu0 0.0
    %402 = vmatprep.subr.mxu0 0.0
    %403 = vmatpush1.msra.mxu0 0.0
    %404 = vmatprep.subr.mxu0 0.0
    %405 = vmatpush1.msra.mxu0 0.0
    %406 = vmatprep.subr.mxu0 0.0
    %407 = vmatpush1.msra.mxu0 0.0
    %408 = vmatprep.subr.mxu0 0.0
    %409 = vmatpush1.msra.mxu0 0.0
    %410 = vmatprep.subr.mxu0 0.0
    %411 = vmatpush1.msra.mxu0 0.0
    %412 = vmatprep.subr.mxu0 0.0
    %413 = vmatpush1.msra.mxu0 0.0
    %414 = vmatprep.subr.mxu0 0.0
    %415 = vmatpush1.msra.mxu0 0.0
    %416 = vmatprep.subr.mxu0 0.0
    %417 = vmatpush1.msra.mxu0 0.0
    %418 = vmatprep.subr.mxu0 0.0
    %419 = vmatpush1.msra.mxu0 0.0
    %420 = vmatprep.subr.mxu0 0.0
    %421 = vmatpush1.msra.mxu0 0.0
    %422 = vmatprep.subr.mxu0 0.0
    %423 = vmatpush1.msra.mxu0 0.0
    %424 = vmatprep.subr.mxu0 0.0
    %425 = vmatpush1.msra.mxu0 0.0
    %426 = vmatprep.subr.mxu0 0.0
    %427 = vmatpush1.msra.mxu0 0.0
    %428 = vmatprep.subr.mxu0 0.0
    %429 = vmatpush1.msra.mxu0 0.0
    %430 = vmatprep.subr.mxu0 0.0
    %431 = vmatpush1.msra.mxu0 0.0
    %432 = vmatprep.subr.mxu0 0.0
    %433 = vmatpush1.msra.mxu0 0.0
    %434 = vmatprep.subr.mxu0 0.0
    %435 = vmatpush1.msra.mxu0 0.0
    %436 = vmatprep.subr.mxu0 0.0
    %437 = vmatpush1.msra.mxu0 0.0
    %438 = vmatprep.subr.mxu0 0.0
    %439 = vmatpush1.msra.mxu0 0.0
    %440 = vmatprep.subr.mxu0 0.0
    %441 = vmatpush1.msra.mxu0 0.0
    %442 = vmatprep.subr.mxu0 0.0
    %443 = vmatpush1.msra.mxu0 0.0
    %444 = vmatprep.subr.mxu0 0.0
    %445 = vmatpush1.msra.mxu0 0.0
    %446 = vmatprep.subr.mxu0 0.0
    %447 = vmatpush1.msra.mxu0 0.0
    %448 = vmatprep.subr.mxu0 0.0
    %449 = vmatpush1.msra.mxu0 0.0
    %450 = vmatprep.subr.mxu0 0.0
    %451 = vmatpush1.msra.mxu0 0.0
    %452 = vmatprep.subr.mxu0 0.0
    %453 = vmatpush1.msra.mxu0 0.0
    %454 = vmatprep.subr.mxu0 0.0
    %455 = vmatpush1.msra.mxu0 0.0
    %456 = vmatprep.mubr.f32.mxu0 0.0
    %457 = vmatmul.mubr.f32.gmra.mrb[0].mxu0 %v390
    %v458 = vpop.f32.mrb[0].mxu0
    %v459 = vadd.f32 0.0, %v458
    %v460 = vpop.f32.mrb[0].mxu0
    %461 = vdwg.mxu0
    %v463 = vcombine.high %v459, %v459
    %vm465 = vcmask 125952
    %466 = vst.msk [vmem:[#allocation11] sm:$0xf] %vm465, %v459
    %467 = vst.msk [vmem:[#allocation11 + $0x4] sm:$0xf] %vm465, %v463
    // Predicated region
    $region42: #{tpu_custom_call.1} parent=1 // pred_check
      _
    $region43: #{tpu_custom_call.1} parent=1 // pred_check_branch
      %469 = sbr.rel (0) target = $region45
    $region44: #{tpu_custom_call.1} parent=1 // pred_region
      %s471 = ssub.s32 128, 128
      %472 = vsyncadd [#allocation4], %s471
      %s473 = sshll.u32 [#allocation11], 4
      %s474 = int_to_ptr.vmem [resolvable:$true] %s473
      %479 = dma.vmem_to_hbm [thread:$0]  %s474, 128, %s5, [#allocation4], 64, 64, 4
    $region45: #{tpu_custom_call.1} parent=1 // pred_fallthru
      _
    // Predicated region
    $region46: #{tpu_custom_call.1} parent=1 // pred_check
      _
    $region47: #{tpu_custom_call.1} parent=1 // pred_check_branch
      %481 = sbr.rel (0) target = $region49
    $region48: #{tpu_custom_call.1} parent=1 // pred_region
      %482 = dma.done [#allocation4], 128
    $region49: #{tpu_custom_call.1} parent=1 // pred_fallthru
      _
    %483 = vsyncpa [#allocation3], 1
    %484 = vsyncpa [#allocation6], 1
    %485 = vsyncpa [#allocation9], 1
    %486 = vsyncpa [#allocation4], 1

</llo_original>
